<compile_context>
chip_gen: v7x
topology: tpu7x:2x2x1
jax: 0.10.0
libtpu: 0.0.40
codegen_flags: <defaults>
</compile_context>

<pallas_src>
import functools

import jax
import jax.numpy as jnp
from jax.experimental import pallas as pl
from jax.experimental.pallas import tpu as pltpu


def superpixel_mean_embed_kernel(x_ref, seg_ref, w_ref, b_ref, o_ref, acc_ref,
                                 *, num_sp, cin):
    # x_ref:   (1, TP, Cin+1) f32   pixel tile, channels last, last column == 1.0
    # seg_ref: (1, 1, TP)     i32   superpixel label per pixel (lane-major)
    # w_ref:   (Cin, E)       f32   1x1 conv weight (reshaped)
    # b_ref:   (1, E)         f32   conv bias
    # o_ref:   (1, N, E)      f32   per-superpixel mean embeddings
    # acc_ref: (N, Cin+1)     f32   resident accumulator: [raw-pixel sums | counts]
    k = pl.program_id(1)

    @pl.when(k == 0)
    def _():
        acc_ref[...] = jnp.zeros_like(acc_ref)

    x = x_ref[0]                                               # (TP, Cin+1)
    seg = seg_ref[0]                                           # (1, TP)

    # One-hot generated directly in (N, TP) orientation (no transpose later).
    sp_ids = jax.lax.broadcasted_iota(jnp.int32, (num_sp, x.shape[0]), 0)
    onehot = (sp_ids == seg).astype(jnp.float32)               # (N, TP)

    # Single MXU pass: per-superpixel raw-pixel sums AND counts (ones column).
    acc_ref[...] += jnp.dot(onehot, x, preferred_element_type=jnp.float32)

    @pl.when(k == pl.num_programs(1) - 1)
    def _():
        acc = acc_ref[...]                                     # (N, Cin+1)
        sums = acc[:, :cin]                                    # (N, Cin)
        counts = acc[:, cin:cin + 1]                           # (N, 1)
        inv = pl.reciprocal(jnp.maximum(counts, 1.0), approx=False)
        means = sums * inv                                     # (N, Cin)
        # Tiny projection (linearity: mean(Wx + b) == W mean(x) + b).
        o_ref[0] = (jnp.dot(means, w_ref[...],
                            preferred_element_type=jnp.float32) + b_ref[...])


def _pick_pixel_tile(p):
    # Largest convenient tile that divides P (keeps (8,128) layout happy).
    for tp in (2048, 1024, 512, 256, 128):
        if p % tp == 0:
            return tp
    return p


def superpixel_mean_embed(x_nchw, seg_hw, weight, bias, num_sp):
    """x_nchw: (B, Cin, H, W); seg_hw: (B, H, W) int labels in [0, num_sp)."""
    B, Cin, H, W = x_nchw.shape
    P = H * W
    E = weight.shape[1]
    TP = _pick_pixel_tile(P)

    # Glue (plain JAX): NCHW -> (B, P, Cin+1) pixel-major, channels last, with a
    # fused ones column so counts fall out of the pooling matmul for free.
    x_flat = jnp.transpose(x_nchw, (0, 2, 3, 1)).reshape(B, P, Cin).astype(jnp.float32)
    x_aug = jnp.concatenate([x_flat, jnp.ones((B, P, 1), jnp.float32)], axis=-1)
    seg_flat = seg_hw.reshape(B, 1, P).astype(jnp.int32)
    b2 = bias.reshape(1, E).astype(jnp.float32)
    w2 = weight.astype(jnp.float32)

    kernel = functools.partial(superpixel_mean_embed_kernel, num_sp=num_sp, cin=Cin)

    # VMEM budget: 2x-buffered input tiles + onehot + accumulator + params + out.
    # Explicit limit with headroom, capped well under v7x's 64 MiB physical VMEM.
    tile_bytes = (2 * (TP * (Cin + 1) * 4 + TP * 4)
                  + TP * num_sp * 4
                  + num_sp * (Cin + 1) * 4
                  + 2 * ((Cin + 1) * E * 4 + E * 4)
                  + 2 * num_sp * E * 4)
    vmem_limit = int(min(max(4 * tile_bytes, 16 << 20), 32 << 20))

    return pl.pallas_call(
        kernel,
        out_shape=jax.ShapeDtypeStruct((B, num_sp, E), jnp.float32),
        grid_spec=pltpu.PrefetchScalarGridSpec(
            num_scalar_prefetch=0,
            grid=(B, P // TP),
            in_specs=[
                pl.BlockSpec((1, TP, Cin + 1), lambda b, k: (b, k, 0)),
                pl.BlockSpec((1, 1, TP), lambda b, k: (b, 0, k)),
                pl.BlockSpec((Cin, E), lambda b, k: (0, 0)),
                pl.BlockSpec((1, E), lambda b, k: (0, 0)),
            ],
            out_specs=pl.BlockSpec((1, num_sp, E), lambda b, k: (b, 0, 0)),
            scratch_shapes=[pltpu.VMEM((num_sp, Cin + 1), jnp.float32)],
        ),
        compiler_params=pltpu.CompilerParams(
            dimension_semantics=("parallel", "arbitrary"),
            vmem_limit_bytes=vmem_limit,
        ),
    )(x_aug, seg_flat, w2, b2)


def reference(x_nchw, seg_hw, weight, bias, num_sp):
    B, Cin, H, W = x_nchw.shape
    P = H * W
    x_flat = jnp.transpose(x_nchw, (0, 2, 3, 1)).reshape(B, P, Cin)
    emb = jnp.einsum("bpc,ce->bpe", x_flat, weight) + bias[None, None, :]
    onehot = jax.nn.one_hot(seg_hw.reshape(B, P), num_sp, dtype=jnp.float32)  # (B, P, N)
    sums = jnp.einsum("bpn,bpe->bne", onehot, emb)
    counts = jnp.sum(onehot, axis=1)[..., None]
    return sums / counts


if __name__ == "__main__":
    # Small shapes consistent with the module's forward.
    B, Cin, H, W = 2, 4, 16, 16
    embed_dim = 32
    superpixels = 64  # 8x8 grid of 2x2-pixel superpixels

    key = jax.random.PRNGKey(0)
    kx, kw, kb, kperm = jax.random.split(key, 4)

    x = jax.random.normal(kx, (B, Cin, H, W), dtype=jnp.float32)

    # Conv2d(Cin, E, kernel_size=1) weight (E, Cin, 1, 1) collapses to (Cin, E).
    w = jax.random.normal(kw, (Cin, embed_dim), dtype=jnp.float32) * 0.1
    b = jax.random.normal(kb, (embed_dim,), dtype=jnp.float32) * 0.1

    # Synthetic segmentation masks: regular 2x2 blocks, per-image random
    # relabeling so batches differ (every label in [0, N) is non-empty).
    hh = jnp.arange(H)[:, None] // 2
    ww = jnp.arange(W)[None, :] // 2
    base_seg = (hh * (W // 2) + ww).astype(jnp.int32)          # (H, W), labels 0..63
    perms = jnp.stack(
        [jax.random.permutation(jax.random.fold_in(kperm, i), superpixels)
         for i in range(B)], axis=0)                           # (B, N)
    seg = jnp.stack([perms[i][base_seg] for i in range(B)], axis=0)  # (B, H, W)

    out = superpixel_mean_embed(x, seg, w, b, superpixels)
    out = jax.block_until_ready(out)

    ref = reference(x, seg, w, b, superpixels)
    assert out.shape == (B, superpixels, embed_dim)
    assert jnp.allclose(out, ref, atol=1e-5, rtol=1e-5), "mismatch vs reference"

    print("KERNEL_OK")
</pallas_src>

<mosaic_0001>
module attributes {stable_mosaic.version = 11 : i64} {
  func.func @superpixel_mean_embed_kernel(%arg0: i32, %arg1: i32, %arg2: memref<1x256x5xf32, #tpu.memory_space<vmem>>, %arg3: memref<1x1x256xi32, #tpu.memory_space<vmem>>, %arg4: memref<4x32xf32, #tpu.memory_space<vmem>>, %arg5: memref<1x32xf32, #tpu.memory_space<vmem>>, %arg6: memref<1x64x32xf32, #tpu.memory_space<vmem>>, %arg7: memref<64x5xf32, #tpu.memory_space<vmem>>) attributes {dimension_semantics = [#tpu.dimension_semantics<parallel>, #tpu.dimension_semantics<arbitrary>], iteration_bounds = array<i64: 2, 1>, scalar_prefetch = 0 : i64, scratch_operands = 1 : i64, tpu.core_type = #tpu.core_type<tc>, window_params = [{transform_indices = @transform_0, window_bounds = array<i64: 1, 256, 5>}, {transform_indices = @transform_1, window_bounds = array<i64: 1, 1, 256>}, {pipeline_mode = #tpu.pipeline_mode<synchronous>, transform_indices = @transform_2, window_bounds = array<i64: 4, 32>}, {pipeline_mode = #tpu.pipeline_mode<synchronous>, transform_indices = @transform_3, window_bounds = array<i64: 1, 32>}, {transform_indices = @transform_4, window_bounds = array<i64: 1, 64, 32>}]} {
    %c0_i32 = arith.constant 0 : i32
    %0 = arith.cmpi eq, %arg1, %c0_i32 : i32
    %1 = arith.extui %0 : i1 to i32
    %c0_i32_0 = arith.constant 0 : i32
    %2 = arith.cmpi ne, %1, %c0_i32_0 : i32
    scf.if %2 {
      %cst_12 = arith.constant 0.000000e+00 : f32
      %19 = vector.broadcast %cst_12 : f32 to vector<64x5xf32>
      %c0_13 = arith.constant 0 : index
      %c0_14 = arith.constant 0 : index
      %20 = vector.load %arg7[%c0_13, %c0_14] : memref<64x5xf32, #tpu.memory_space<vmem>>, vector<64x5xf32>
      tpu.vector_store %arg7[%c0_13, %c0_14], %19 {strides = array<i32>} : memref<64x5xf32, #tpu.memory_space<vmem>>, vector<64x5xf32>,
    } else {
    }
    %c0 = arith.constant 0 : index
    %c0_1 = arith.constant 0 : index
    %c0_2 = arith.constant 0 : index
    %3 = vector.load %arg2[%c0, %c0_1, %c0_2] : memref<1x256x5xf32, #tpu.memory_space<vmem>>, vector<1x256x5xf32>
    %4 = vector.shape_cast %3 : vector<1x256x5xf32> to vector<256x5xf32>
    %c0_3 = arith.constant 0 : index
    %c0_4 = arith.constant 0 : index
    %c0_5 = arith.constant 0 : index
    %5 = vector.load %arg3[%c0_3, %c0_4, %c0_5] : memref<1x1x256xi32, #tpu.memory_space<vmem>>, vector<1x1x256xi32>
    %6 = vector.shape_cast %5 : vector<1x1x256xi32> to vector<1x256xi32>
    %7 = tpu.iota {dimensions = array<i32: 0>} : vector<64x256xi32>
    %8 = vector.broadcast %6 : vector<1x256xi32> to vector<64x256xi32>
    %9 = arith.cmpi eq, %7, %8 : vector<64x256xi32>
    %10 = arith.extui %9 : vector<64x256xi1> to vector<64x256xi32>
    %11 = arith.sitofp %10 : vector<64x256xi32> to vector<64x256xf32>
    %c0_6 = arith.constant 0 : index
    %c0_7 = arith.constant 0 : index
    %12 = vector.load %arg7[%c0_6, %c0_7] : memref<64x5xf32, #tpu.memory_space<vmem>>, vector<64x5xf32>
    %cst = arith.constant dense<0.000000e+00> : vector<64x5xf32>
    %13 = tpu.matmul %11, %4, %cst {dimension_numbers = #tpu.dot_dimension_numbers<[1], [0], [0], [1], [0, 0, 1, 1], [], []>} : vector<64x256xf32>, vector<256x5xf32>, vector<64x5xf32> -> vector<64x5xf32>
    %14 = arith.addf %12, %13 : vector<64x5xf32>
    %c0_8 = arith.constant 0 : index
    %c0_9 = arith.constant 0 : index
    %15 = vector.load %arg7[%c0_8, %c0_9] : memref<64x5xf32, #tpu.memory_space<vmem>>, vector<64x5xf32>
    tpu.vector_store %arg7[%c0_8, %c0_9], %14 {strides = array<i32>} : memref<64x5xf32, #tpu.memory_space<vmem>>, vector<64x5xf32>,
    %c0_i32_10 = arith.constant 0 : i32
    %16 = arith.cmpi eq, %arg1, %c0_i32_10 : i32
    %17 = arith.extui %16 : i1 to i32
    %c0_i32_11 = arith.constant 0 : i32
    %18 = arith.cmpi ne, %17, %c0_i32_11 : i32
    scf.if %18 {
      %c0_12 = arith.constant 0 : index
      %c0_13 = arith.constant 0 : index
      %19 = vector.load %arg7[%c0_12, %c0_13] : memref<64x5xf32, #tpu.memory_space<vmem>>, vector<64x5xf32>
      %20 = vector.extract_strided_slice %19 {offsets = [0, 0], sizes = [64, 4], strides = [1, 1]} : vector<64x5xf32> to vector<64x4xf32>
      %21 = vector.extract_strided_slice %19 {offsets = [0, 4], sizes = [64, 1], strides = [1, 1]} : vector<64x5xf32> to vector<64x1xf32>
      %cst_14 = arith.constant 1.000000e+00 : f32
      %22 = vector.broadcast %cst_14 : f32 to vector<64x1xf32>
      %23 = arith.maximumf %21, %22 : vector<64x1xf32>
      %24 = tpu.reciprocal %23 : vector<64x1xf32> -> vector<64x1xf32>
      %25 = vector.broadcast %24 : vector<64x1xf32> to vector<64x4xf32>
      %26 = arith.mulf %20, %25 : vector<64x4xf32>
      %c0_15 = arith.constant 0 : index
      %c0_16 = arith.constant 0 : index
      %27 = vector.load %arg4[%c0_15, %c0_16] : memref<4x32xf32, #tpu.memory_space<vmem>>, vector<4x32xf32>
      %cst_17 = arith.constant dense<0.000000e+00> : vector<64x32xf32>
      %28 = tpu.matmul %26, %27, %cst_17 {dimension_numbers = #tpu.dot_dimension_numbers<[1], [0], [0], [1], [0, 0, 1, 1], [], []>} : vector<64x4xf32>, vector<4x32xf32>, vector<64x32xf32> -> vector<64x32xf32>
      %c0_18 = arith.constant 0 : index
      %c0_19 = arith.constant 0 : index
      %29 = vector.load %arg5[%c0_18, %c0_19] : memref<1x32xf32, #tpu.memory_space<vmem>>, vector<1x32xf32>
      %30 = vector.broadcast %29 : vector<1x32xf32> to vector<64x32xf32>
      %31 = arith.addf %28, %30 : vector<64x32xf32>
      %c0_20 = arith.constant 0 : index
      %c0_21 = arith.constant 0 : index
      %c0_22 = arith.constant 0 : index
      %32 = vector.load %arg6[%c0_20, %c0_21, %c0_22] : memref<1x64x32xf32, #tpu.memory_space<vmem>>, vector<1x64x32xf32>
      %33 = vector.shape_cast %32 : vector<1x64x32xf32> to vector<64x32xf32>
      %34 = vector.shape_cast %31 : vector<64x32xf32> to vector<1x64x32xf32>
      tpu.vector_store %arg6[%c0_20, %c0_21, %c0_22], %34 {strides = array<i32>} : memref<1x64x32xf32, #tpu.memory_space<vmem>>, vector<1x64x32xf32>,
    } else {
    }
    return
  }
  func.func @transform_0(%arg0: i32, %arg1: i32) -> (i32, i32, i32) {
    %c0_i32 = arith.constant 0 : i32
    %c0_i32_0 = arith.constant 0 : i32
    return %arg0, %arg1, %c0_i32 : i32, i32, i32
  }
  func.func @transform_1(%arg0: i32, %arg1: i32) -> (i32, i32, i32) {
    %c0_i32 = arith.constant 0 : i32
    %c0_i32_0 = arith.constant 0 : i32
    return %arg0, %c0_i32, %arg1 : i32, i32, i32
  }
  func.func @transform_2(%arg0: i32, %arg1: i32) -> (i32, i32) {
    %c0_i32 = arith.constant 0 : i32
    %c0_i32_0 = arith.constant 0 : i32
    %c0_i32_1 = arith.constant 0 : i32
    return %c0_i32, %c0_i32_0 : i32, i32
  }
  func.func @transform_3(%arg0: i32, %arg1: i32) -> (i32, i32) {
    %c0_i32 = arith.constant 0 : i32
    %c0_i32_0 = arith.constant 0 : i32
    %c0_i32_1 = arith.constant 0 : i32
    return %c0_i32, %c0_i32_0 : i32, i32
  }
  func.func @transform_4(%arg0: i32, %arg1: i32) -> (i32, i32, i32) {
    %c0_i32 = arith.constant 0 : i32
    %c0_i32_0 = arith.constant 0 : i32
    %c0_i32_1 = arith.constant 0 : i32
    return %arg0, %c0_i32, %c0_i32_0 : i32, i32, i32
  }
}

</mosaic_0001>

<llo_original>
// kernel: tpu_custom_call.1
$region0: #{tpu_custom_call.1}
  #allocation0 [shape = 'u32[]', space=smem, size = 0x4, offset = 0x4, fixed_abs, tag = 'smem constant byte address 0x4 - core index']
  #allocation1 [shape = 'u32[144,128]{1,0:T(1,128)}', space=vmem, size = 0x12000, scoped, tag = 'internal scratch']
  #allocation2 [shape = 'f32[64,5]{1,0:T(8,128)}', space=vmem, size = 0x8000, scoped, tag = 'scratch operand']
  %s0 = inlined_call_operand.vmem [shape: f32[2,256,5], index: 0, kind: input, shape index: {}]
  %s1 = inlined_call_operand.vmem [shape: s32[2,1,256], index: 1, kind: input, shape index: {}]
  %s2 = inlined_call_operand.vmem [shape: f32[4,32], index: 2, kind: input, shape index: {}]
  %s3 = inlined_call_operand.vmem [shape: f32[1,32], index: 3, kind: input, shape index: {}]
  %s4 = inlined_call_operand.vmem [shape: f32[2,64,32], index: 4, kind: output, shape index: {}]
  %s5 = sld [smem:[#allocation0]]
  $region57: #{tpu_custom_call.1} parent=0
    _
  %s7 = ssub.s32 1, %s5
  %s8 = scalar_select 0, %s7, %s5
  loop: start=0, step=1, limit=4
  $region2: #{tpu_custom_call.1} parent=0 // loop_pre_header
    _
  $region3: #{tpu_custom_call.1} parent=0 // loop_header
    %s10 = sphi 0, %s14
    %p11 = scmp.ge.s32.totalorder %s10, 4
    %s17 = sphi 0, %s29
    %s18 = sphi 0, %s25
    %s19 = sphi 0, %s17
    %s20 = sphi 0, %s18
    %s21 = sphi 0, %s19
    %s22 = sphi 0, %s20
    %s34 = sphi 0, %s36
    %s37 = sphi 0, %s34
    %s38 = sphi 0, %s37
    %s54 = sphi 0, %s38
    %s62 = sphi 0, %s64
    %s65 = sphi 0, %s62
    %s66 = sphi 0, %s65
    %s82 = sphi 0, %s66
    %s86 = sphi 0, %s86
    %s88 = sphi 0, %s86
    %s89 = sphi 0, %s88
    %s103 = sphi 0, %s89
    %s107 = sphi 0, %s107
    %s109 = sphi 0, %s107
    %s110 = sphi 0, %s109
    %s124 = sphi 0, %s110
    %s130 = sphi 0, %s132
    %s133 = sphi 0, %s130
    %s134 = sphi 0, %s133
    %s150 = sphi 0, %s134
  $region4: #{tpu_custom_call.1} parent=0 // loop_header_branch
    %13 = sbr.rel (%p11) target = $region8
  $region5: #{tpu_custom_call.1} parent=0 // loop_body
    %s15 = ssub.s32 %s10, 1
    %s16 = ssub.s32 %s10, 2
    %s23 = sadd.s32 1, %s18
    %p24 = scmp.ge.s32.totalorder %s23, 1
    %s25 = scalar_select %p24, 0, %s23
    %s26 = sadd.s32 1, %s17
    %s27 = scalar_select %p24, %s26, %s17
    %p28 = scmp.ge.s32.totalorder %s27, 2
    %s29 = scalar_select %p28, 0, %s27
    %s30 = ssub.s32 %s17, %s29
    %s31 = ssub.s32 %s18, %s25
    %s32 = sor.u32 %s30, %s31
    %p33 = scmp.eq.s32.totalorder %s32, 0
    %s35 = sadd.s32 %s34, 1
    %s36 = scalar_select %p33, %s34, %s35
    %p39 = pneg %p33
    %p40 = scmp.eq.s32.totalorder %s10, 1
    %p41 = por %p39, %p40
    %p42 = scmp.ne.s32.totalorder %s34, %s37
    %p43 = scmp.eq.s32.totalorder %s10, 0
    %p44 = por %p42, %p43
    %p45 = scmp.ne.s32.totalorder %s34, %s37
    %p46 = scmp.eq.s32.totalorder %s15, 1
    %p47 = por %p45, %p46
    %p48 = scmp.ne.s32.totalorder %s37, %s38
    %p49 = scmp.eq.s32.totalorder %s15, 0
    %p50 = por %p48, %p49
    %p51 = scmp.ne.s32.totalorder %s37, %s38
    %p52 = scmp.eq.s32.totalorder %s16, 1
    %p53 = por %p51, %p52
    %p55 = scmp.ne.s32.totalorder %s38, %s54
    %p56 = scmp.eq.s32.totalorder %s16, 0
    %p57 = por %p55, %p56
    %s58 = ssub.s32 %s17, %s29
    %s59 = ssub.s32 %s18, %s25
    %s60 = sor.u32 %s58, %s59
    %p61 = scmp.eq.s32.totalorder %s60, 0
    %s63 = sadd.s32 %s62, 1
    %s64 = scalar_select %p61, %s62, %s63
    %p67 = pneg %p61
    %p68 = scmp.eq.s32.totalorder %s10, 1
    %p69 = por %p67, %p68
    %p70 = scmp.ne.s32.totalorder %s62, %s65
    %p71 = scmp.eq.s32.totalorder %s10, 0
    %p72 = por %p70, %p71
    %p73 = scmp.ne.s32.totalorder %s62, %s65
    %p74 = scmp.eq.s32.totalorder %s15, 1
    %p75 = por %p73, %p74
    %p76 = scmp.ne.s32.totalorder %s65, %s66
    %p77 = scmp.eq.s32.totalorder %s15, 0
    %p78 = por %p76, %p77
    %p79 = scmp.ne.s32.totalorder %s65, %s66
    %p80 = scmp.eq.s32.totalorder %s16, 1
    %p81 = por %p79, %p80
    %p83 = scmp.ne.s32.totalorder %s66, %s82
    %p84 = scmp.eq.s32.totalorder %s16, 0
    %p85 = por %p83, %p84
    %s87 = sadd.s32 %s86, 1
    %p90 = scmp.eq.s32.totalorder %s10, 1
    %p91 = scmp.ne.s32.totalorder %s86, %s88
    %p92 = scmp.eq.s32.totalorder %s10, 0
    %p93 = por %p91, %p92
    %p94 = scmp.ne.s32.totalorder %s86, %s88
    %p95 = scmp.eq.s32.totalorder %s15, 1
    %p96 = por %p94, %p95
    %p97 = scmp.ne.s32.totalorder %s88, %s89
    %p98 = scmp.eq.s32.totalorder %s15, 0
    %p99 = por %p97, %p98
    %p100 = scmp.ne.s32.totalorder %s88, %s89
    %p101 = scmp.eq.s32.totalorder %s16, 1
    %p102 = por %p100, %p101
    %p104 = scmp.ne.s32.totalorder %s89, %s103
    %p105 = scmp.eq.s32.totalorder %s16, 0
    %p106 = por %p104, %p105
    %s108 = sadd.s32 %s107, 1
    %p111 = scmp.eq.s32.totalorder %s10, 1
    %p112 = scmp.ne.s32.totalorder %s107, %s109
    %p113 = scmp.eq.s32.totalorder %s10, 0
    %p114 = por %p112, %p113
    %p115 = scmp.ne.s32.totalorder %s107, %s109
    %p116 = scmp.eq.s32.totalorder %s15, 1
    %p117 = por %p115, %p116
    %p118 = scmp.ne.s32.totalorder %s109, %s110
    %p119 = scmp.eq.s32.totalorder %s15, 0
    %p120 = por %p118, %p119
    %p121 = scmp.ne.s32.totalorder %s109, %s110
    %p122 = scmp.eq.s32.totalorder %s16, 1
    %p123 = por %p121, %p122
    %p125 = scmp.ne.s32.totalorder %s110, %s124
    %p126 = scmp.eq.s32.totalorder %s16, 0
    %p127 = por %p125, %p126
    %s128 = ssub.s32 %s17, %s29
    %p129 = scmp.eq.s32.totalorder %s128, 0
    %s131 = sadd.s32 %s130, 1
    %s132 = scalar_select %p129, %s130, %s131
    %p135 = pneg %p129
    %p136 = scmp.eq.s32.totalorder %s10, 1
    %p137 = por %p135, %p136
    %p138 = scmp.ne.s32.totalorder %s130, %s133
    %p139 = scmp.eq.s32.totalorder %s10, 0
    %p140 = por %p138, %p139
    %p141 = scmp.ne.s32.totalorder %s130, %s133
    %p142 = scmp.eq.s32.totalorder %s15, 1
    %p143 = por %p141, %p142
    %p144 = scmp.ne.s32.totalorder %s133, %s134
    %p145 = scmp.eq.s32.totalorder %s15, 0
    %p146 = por %p144, %p145
    %p147 = scmp.ne.s32.totalorder %s133, %s134
    %p148 = scmp.eq.s32.totalorder %s16, 1
    %p149 = por %p147, %p148
    %p151 = scmp.ne.s32.totalorder %s134, %s150
    %p152 = scmp.eq.s32.totalorder %s16, 0
    %p153 = por %p151, %p152
    %p154 = scmp.le.s32.totalorder 1, %s10
    %p155 = scmp.lt.s32.totalorder %s10, 3
    %p156 = pnand %p154, %p155
    %p157 = pneg %p156
    // Predicated region
    $region9: #{tpu_custom_call.1} parent=5 // pred_check
      _
    $region10: #{tpu_custom_call.1} parent=5 // pred_check_branch
      %159 = sbr.rel (%p156) target = $region12
    $region11: #{tpu_custom_call.1} parent=5 // pred_region
      %s160 = ssub.s32 %s10, 1
      // Predicated region
      $region13: #{tpu_custom_call.1} parent=11 // pred_check
        %p161 = pneg %p99
      $region14: #{tpu_custom_call.1} parent=11 // pred_check_branch
        %163 = sbr.rel (%p161) target = $region16
      $region15: #{tpu_custom_call.1} parent=11 // pred_region
        _
      $region16: #{tpu_custom_call.1} parent=11 // pred_fallthru
        _
      // Predicated region
      $region17: #{tpu_custom_call.1} parent=11 // pred_check
        %p164 = pneg %p120
      $region18: #{tpu_custom_call.1} parent=11 // pred_check_branch
        %166 = sbr.rel (%p164) target = $region20
      $region19: #{tpu_custom_call.1} parent=11 // pred_region
        _
      $region20: #{tpu_custom_call.1} parent=11 // pred_fallthru
        _
    $region12: #{tpu_custom_call.1} parent=5 // pred_fallthru
      _
    %p167 = scmp.lt.s32.totalorder %s10, 2
    // Predicated region
    $region21: #{tpu_custom_call.1} parent=5 // pred_check
      %p168 = pneg %p167
    $region22: #{tpu_custom_call.1} parent=5 // pred_check_branch
      %170 = sbr.rel (%p168) target = $region24
    $region23: #{tpu_custom_call.1} parent=5 // pred_region
      // Predicated region
      $region25: #{tpu_custom_call.1} parent=23 // pred_check
        %p171 = pneg %p44
      $region26: #{tpu_custom_call.1} parent=23 // pred_check_branch
        %173 = sbr.rel (%p171) target = $region28
      $region27: #{tpu_custom_call.1} parent=23 // pred_region
        %s174 = smul.u32 32, %s18
        %p175 = scmp.lt.s32.totalorder %s17, 1
        %s176 = scalar_select %p175, %s17, 1
        %p177 = scmp.lt.s32.totalorder %s174, 31
        %s178 = scalar_select %p177, %s174, 31
        %s179 = smul.addr %s176, 32
        %s180 = sadd.s32 %s178, %s179
        %s181 = smul.addr %s180, 8
        %s182 = scalar_lea.vmem %s0, %s181
        %s183 = smul.u32 32, %s18
      $region28: #{tpu_custom_call.1} parent=23 // pred_fallthru
        _
      // Predicated region
      $region29: #{tpu_custom_call.1} parent=23 // pred_check
        %p184 = pneg %p72
      $region30: #{tpu_custom_call.1} parent=23 // pred_check_branch
        %186 = sbr.rel (%p184) target = $region32
      $region31: #{tpu_custom_call.1} parent=23 // pred_region
        %s187 = smul.u32 2, %s18
        %p188 = scmp.lt.s32.totalorder %s17, 1
        %s189 = scalar_select %p188, %s17, 1
        %p190 = scmp.lt.s32.totalorder %s187, 1
        %s191 = scalar_select %p190, %s187, 1
        %s192 = smul.addr %s189, 2
        %s193 = sadd.s32 %s191, %s192
        %s194 = scalar_lea.vmem %s1, %s193
        %s195 = smul.u32 2, %s18
      $region32: #{tpu_custom_call.1} parent=23 // pred_fallthru
        _
    $region24: #{tpu_custom_call.1} parent=5 // pred_fallthru
      _
    %p196 = scmp.le.s32.totalorder 1, %s10
    %p197 = scmp.lt.s32.totalorder %s10, 3
    %p198 = pnand %p196, %p197
    %p199 = pneg %p198
    // Predicated region
    $region33: #{tpu_custom_call.1} parent=5 // pred_check
      _
    $region34: #{tpu_custom_call.1} parent=5 // pred_check_branch
      %201 = sbr.rel (%p198) target = $region36
    $region35: #{tpu_custom_call.1} parent=5 // pred_region
      %s202 = ssub.s32 %s10, 1
      %s203 = smul.u32 32, %s20
      %p204 = scmp.lt.s32.totalorder %s19, 1
      %s205 = scalar_select %p204, %s19, 1
      %p206 = scmp.lt.s32.totalorder %s203, 31
      %s207 = scalar_select %p206, %s203, 31
      %s208 = smul.addr %s205, 32
      %s209 = sadd.s32 %s207, %s208
      %s210 = smul.addr %s209, 8
      %s211 = scalar_lea.vmem %s0, %s210
      %p212 = pneg %p50
      %p213 = pneg %p47
      %s214 = smul.u32 2, %s20
      %p215 = scmp.lt.s32.totalorder %s19, 1
      %s216 = scalar_select %p215, %s19, 1
      %p217 = scmp.lt.s32.totalorder %s214, 1
      %s218 = scalar_select %p217, %s214, 1
      %s219 = smul.addr %s216, 2
      %s220 = sadd.s32 %s218, %s219
      %s221 = scalar_lea.vmem %s1, %s220
      %p222 = pneg %p78
      %p223 = pneg %p75
      %p224 = pneg %p99
      %p225 = pneg %p96
      %p226 = pneg %p120
      %p227 = pneg %p117
      %p228 = pneg %p146
      %p229 = pneg %p143
      %p230 = scmp.lt.s32.totalorder %s19, 1
      %s231 = scalar_select %p230, %s19, 1
      %s232 = smul.addr %s231, 8
      %s233 = smul.addr %s232, 8
      %s234 = scalar_lea.vmem %s4, %s233
      %s235 = smul.u32 32, %s20
      %p236 = scmp.lt.s32.totalorder %s19, 1
      %s237 = scalar_select %p236, %s19, 1
      %p238 = scmp.lt.s32.totalorder %s235, 31
      %s239 = scalar_select %p238, %s235, 31
      %s240 = smul.addr %s237, 32
      %s241 = sadd.s32 %s239, %s240
      %s242 = smul.addr %s241, 8
      %s243 = scalar_lea.vmem %s0, %s242
      %s244 = smul.u32 32, %s20
      %s245 = smul.u32 2, %s20
      %p246 = scmp.lt.s32.totalorder %s19, 1
      %s247 = scalar_select %p246, %s19, 1
      %p248 = scmp.lt.s32.totalorder %s245, 1
      %s249 = scalar_select %p248, %s245, 1
      %s250 = smul.addr %s247, 2
      %s251 = sadd.s32 %s249, %s250
      %s252 = scalar_lea.vmem %s1, %s251
      %s253 = smul.u32 2, %s20
      %p254 = scmp.lt.s32.totalorder %s19, 1
      %s255 = scalar_select %p254, %s19, 1
      %s256 = smul.addr %s255, 8
      %s257 = smul.addr %s256, 8
      %s258 = scalar_lea.vmem %s4, %s257
      %p259 = scmp.eq.s32.totalorder %s20, 0
      // Predicated region
      $region37: #{tpu_custom_call.1} parent=35 // pred_check
        %p260 = pneg %p259
      $region38: #{tpu_custom_call.1} parent=35 // pred_check_branch
        %262 = sbr.rel (%p260) target = $region40
      $region39: #{tpu_custom_call.1} parent=35 // pred_region
        %vm263 = vcmask 39936
        %264 = vst.msk [vmem:[#allocation2] sm:$0xff] %vm263, 0.0
        %265 = vst.msk [vmem:[#allocation2 + $0x8] sm:$0xff] %vm263, 0.0
        %266 = vst.msk [vmem:[#allocation2 + $0x10] sm:$0xff] %vm263, 0.0
        %267 = vst.msk [vmem:[#allocation2 + $0x18] sm:$0xff] %vm263, 0.0
        %268 = vst.msk [vmem:[#allocation2 + $0x20] sm:$0xff] %vm263, 0.0
        %269 = vst.msk [vmem:[#allocation2 + $0x28] sm:$0xff] %vm263, 0.0
        %270 = vst.msk [vmem:[#allocation2 + $0x30] sm:$0xff] %vm263, 0.0
        %271 = vst.msk [vmem:[#allocation2 + $0x38] sm:$0xff] %vm263, 0.0
      $region40: #{tpu_custom_call.1} parent=35 // pred_fallthru
        _
      %v272 = vld [vmem:[%s243] sm:$0xff]
      %v273 = vld [vmem:[%s243 + $0x8] sm:$0xff]
      %v274 = vld [vmem:[%s243 + $0x10] sm:$0xff]
      %v275 = vld [vmem:[%s243 + $0x18] sm:$0xff]
      %v276 = vld [vmem:[%s243 + $0x20] sm:$0xff]
      %v277 = vld [vmem:[%s243 + $0x28] sm:$0xff]
      %v278 = vld [vmem:[%s243 + $0x30] sm:$0xff]
      %v279 = vld [vmem:[%s243 + $0x38] sm:$0xff]
      %v280 = vld [vmem:[%s243 + $0x40] sm:$0xff]
      %v281 = vld [vmem:[%s243 + $0x48] sm:$0xff]
      %v282 = vld [vmem:[%s243 + $0x50] sm:$0xff]
      %v283 = vld [vmem:[%s243 + $0x58] sm:$0xff]
      %v284 = vld [vmem:[%s243 + $0x60] sm:$0xff]
      %v285 = vld [vmem:[%s243 + $0x68] sm:$0xff]
      %v286 = vld [vmem:[%s243 + $0x70] sm:$0xff]
      %v287 = vld [vmem:[%s243 + $0x78] sm:$0xff]
      %v288 = vld [vmem:[%s243 + $0x80] sm:$0xff]
      %v289 = vld [vmem:[%s243 + $0x88] sm:$0xff]
      %v290 = vld [vmem:[%s243 + $0x90] sm:$0xff]
      %v291 = vld [vmem:[%s243 + $0x98] sm:$0xff]
      %v292 = vld [vmem:[%s243 + $0xa0] sm:$0xff]
      %v293 = vld [vmem:[%s243 + $0xa8] sm:$0xff]
      %v294 = vld [vmem:[%s243 + $0xb0] sm:$0xff]
      %v295 = vld [vmem:[%s243 + $0xb8] sm:$0xff]
      %v296 = vld [vmem:[%s243 + $0xc0] sm:$0xff]
      %v297 = vld [vmem:[%s243 + $0xc8] sm:$0xff]
      %v298 = vld [vmem:[%s243 + $0xd0] sm:$0xff]
      %v299 = vld [vmem:[%s243 + $0xd8] sm:$0xff]
      %v300 = vld [vmem:[%s243 + $0xe0] sm:$0xff]
      %v301 = vld [vmem:[%s243 + $0xe8] sm:$0xff]
      %v302 = vld [vmem:[%s243 + $0xf0] sm:$0xff]
      %v303 = vld [vmem:[%s243 + $0xf8] sm:$0xff]
      %v304 = vld [vmem:[%s252] sm:$0x3]
      %v305 = vlaneseq
      %v306 = vshrl.u32 %v305, 7
      %v307 = vadd.s32 %v306, 8
      %v308 = vadd.s32 %v306, 16
      %v309 = vadd.s32 %v306, 24
      %v310 = vadd.s32 %v306, 32
      %v311 = vadd.s32 %v306, 40
      %v312 = vadd.s32 %v306, 48
      %v313 = vadd.s32 %v306, 56
      %v314 = vlaneseq
      %v315 = vshrl.u32 %v314, 7
      %v316 = vsub.s32 0, %v315
      %v317 = vrot.slane %v304, %v316
      %v318 = vlaneseq
      %v319 = vshrl.u32 %v318, 7
      %v320 = vsub.s32 1, %v319
      %v321 = vrot.slane %v304, %v320
      %vm322 = vcmp.eq.s32.totalorder %v306, %v317
      %vm323 = vcmp.eq.s32.totalorder %v306, %v321
      %vm324 = vcmp.eq.s32.totalorder %v307, %v317
      %vm325 = vcmp.eq.s32.totalorder %v307, %v321
      %vm326 = vcmp.eq.s32.totalorder %v308, %v317
      %vm327 = vcmp.eq.s32.totalorder %v308, %v321
      %vm328 = vcmp.eq.s32.totalorder %v309, %v317
      %vm329 = vcmp.eq.s32.totalorder %v309, %v321
      %vm330 = vcmp.eq.s32.totalorder %v310, %v317
      %vm331 = vcmp.eq.s32.totalorder %v310, %v321
      %vm332 = vcmp.eq.s32.totalorder %v311, %v317
      %vm333 = vcmp.eq.s32.totalorder %v311, %v321
      %vm334 = vcmp.eq.s32.totalorder %v312, %v317
      %vm335 = vcmp.eq.s32.totalorder %v312, %v321
      %vm336 = vcmp.eq.s32.totalorder %v313, %v317
      %vm337 = vcmp.eq.s32.totalorder %v313, %v321
      %v338 = vsel %vm322, 1, 0
      %v339 = vsel %vm323, 1, 0
      %v340 = vsel %vm324, 1, 0
      %v341 = vsel %vm325, 1, 0
      %v342 = vsel %vm326, 1, 0
      %v343 = vsel %vm327, 1, 0
      %v344 = vsel %vm328, 1, 0
      %v345 = vsel %vm329, 1, 0
      %v346 = vsel %vm330, 1, 0
      %v347 = vsel %vm331, 1, 0
      %v348 = vsel %vm332, 1, 0
      %v349 = vsel %vm333, 1, 0
      %v350 = vsel %vm334, 1, 0
      %v351 = vsel %vm335, 1, 0
      %v352 = vsel %vm336, 1, 0
      %v353 = vsel %vm337, 1, 0
      %v354 = vcvt.s32.f32 %v338
      %v355 = vcvt.s32.f32 %v339
      %v356 = vcvt.s32.f32 %v340
      %v357 = vcvt.s32.f32 %v341
      %v358 = vcvt.s32.f32 %v342
      %v359 = vcvt.s32.f32 %v343
      %v360 = vcvt.s32.f32 %v344
      %v361 = vcvt.s32.f32 %v345
      %v362 = vcvt.s32.f32 %v346
      %v363 = vcvt.s32.f32 %v347
      %v364 = vcvt.s32.f32 %v348
      %v365 = vcvt.s32.f32 %v349
      %v366 = vcvt.s32.f32 %v350
      %v367 = vcvt.s32.f32 %v351
      %v368 = vcvt.s32.f32 %v352
      %v369 = vcvt.s32.f32 %v353
      %v370 = vld [vmem:[#allocation2] sm:$0xff]
      %v371 = vld [vmem:[#allocation2 + $0x8] sm:$0xff]
      %v372 = vld [vmem:[#allocation2 + $0x10] sm:$0xff]
      %v373 = vld [vmem:[#allocation2 + $0x18] sm:$0xff]
      %v374 = vld [vmem:[#allocation2 + $0x20] sm:$0xff]
      %v375 = vld [vmem:[#allocation2 + $0x28] sm:$0xff]
      %v376 = vld [vmem:[#allocation2 + $0x30] sm:$0xff]
      %v377 = vld [vmem:[#allocation2 + $0x38] sm:$0xff]
      %378 = vmatprep.subr.mxu0 0.0
      %379 = vmatpush1.msra.mxu0 %v272
      %380 = vmatprep.subr.mxu0 0.0
      %381 = vmatpush1.msra.mxu0 %v273
      %382 = vmatprep.subr.mxu0 0.0
      %383 = vmatpush1.msra.mxu0 %v274
      %384 = vmatprep.subr.mxu0 0.0
      %385 = vmatpush1.msra.mxu0 %v275
      %386 = vmatprep.subr.mxu0 0.0
      %387 = vmatpush1.msra.mxu0 %v276
      %388 = vmatprep.subr.mxu0 0.0
      %389 = vmatpush1.msra.mxu0 %v277
      %390 = vmatprep.subr.mxu0 0.0
      %391 = vmatpush1.msra.mxu0 %v278
      %392 = vmatprep.subr.mxu0 0.0
      %393 = vmatpush1.msra.mxu0 %v279
      %394 = vmatprep.subr.mxu0 0.0
      %395 = vmatpush1.msra.mxu0 %v280
      %396 = vmatprep.subr.mxu0 0.0
      %397 = vmatpush1.msra.mxu0 %v281
      %398 = vmatprep.subr.mxu0 0.0
      %399 = vmatpush1.msra.mxu0 %v282
      %400 = vmatprep.subr.mxu0 0.0
      %401 = vmatpush1.msra.mxu0 %v283
      %402 = vmatprep.subr.mxu0 0.0
      %403 = vmatpush1.msra.mxu0 %v284
      %404 = vmatprep.subr.mxu0 0.0
      %405 = vmatpush1.msra.mxu0 %v285
      %406 = vmatprep.subr.mxu0 0.0
      %407 = vmatpush1.msra.mxu0 %v286
      %408 = vmatprep.subr.mxu0 0.0
      %409 = vmatpush1.msra.mxu0 %v287
      %410 = vmatprep.subr.mxu0 0.0
      %411 = vmatpush1.msra.mxu0 %v288
      %412 = vmatprep.subr.mxu0 0.0
      %413 = vmatpush1.msra.mxu0 %v289
      %414 = vmatprep.subr.mxu0 0.0
      %415 = vmatpush1.msra.mxu0 %v290
      %416 = vmatprep.subr.mxu0 0.0
      %417 = vmatpush1.msra.mxu0 %v291
      %418 = vmatprep.subr.mxu0 0.0
      %419 = vmatpush1.msra.mxu0 %v292
      %420 = vmatprep.subr.mxu0 0.0
      %421 = vmatpush1.msra.mxu0 %v293
      %422 = vmatprep.subr.mxu0 0.0
      %423 = vmatpush1.msra.mxu0 %v294
      %424 = vmatprep.subr.mxu0 0.0
      %425 = vmatpush1.msra.mxu0 %v295
      %426 = vmatprep.subr.mxu0 0.0
      %427 = vmatpush1.msra.mxu0 %v296
      %428 = vmatprep.subr.mxu0 0.0
      %429 = vmatpush1.msra.mxu0 %v297
      %430 = vmatprep.subr.mxu0 0.0
      %431 = vmatpush1.msra.mxu0 %v298
      %432 = vmatprep.subr.mxu0 0.0
      %433 = vmatpush1.msra.mxu0 %v299
      %434 = vmatprep.subr.mxu0 0.0
      %435 = vmatpush1.msra.mxu0 %v300
      %436 = vmatprep.subr.mxu0 0.0
      %437 = vmatpush1.msra.mxu0 %v301
      %438 = vmatprep.subr.mxu0 0.0
      %439 = vmatpush1.msra.mxu0 %v302
      %440 = vmatprep.subr.mxu0 0.0
      %441 = vmatpush1.msra.mxu0 %v303
      %442 = vmatprep.mubr.f32.mxu0 %v355
      %443 = vmatmul.mubr.f32.gmra.mrb[0].mxu0 %v354
      %v444 = vpop.f32.mrb[0].mxu0
      %v445 = vadd.f32 0.0, %v444
      %v446 = vpop.f32.mrb[0].mxu0
      %447 = vmatprep.mubr.f32.mxu0 %v357
      %448 = vmatmul.mubr.f32.gmra.mrb[0].mxu0 %v356
      %v449 = vpop.f32.mrb[0].mxu0
      %v450 = vadd.f32 0.0, %v449
      %v451 = vpop.f32.mrb[0].mxu0
      %452 = vmatprep.mubr.f32.mxu0 %v359
      %453 = vmatmul.mubr.f32.gmra.mrb[0].mxu0 %v358
      %v454 = vpop.f32.mrb[0].mxu0
      %v455 = vadd.f32 0.0, %v454
      %v456 = vpop.f32.mrb[0].mxu0
      %457 = vmatprep.mubr.f32.mxu0 %v361
      %458 = vmatmul.mubr.f32.gmra.mrb[0].mxu0 %v360
      %v459 = vpop.f32.mrb[0].mxu0
      %v460 = vadd.f32 0.0, %v459
      %v461 = vpop.f32.mrb[0].mxu0
      %462 = vmatprep.mubr.f32.mxu0 %v363
      %463 = vmatmul.mubr.f32.gmra.mrb[0].mxu0 %v362
      %v464 = vpop.f32.mrb[0].mxu0
      %v465 = vadd.f32 0.0, %v464
      %v466 = vpop.f32.mrb[0].mxu0
      %467 = vmatprep.mubr.f32.mxu0 %v365
      %468 = vmatmul.mubr.f32.gmra.mrb[0].mxu0 %v364
      %v469 = vpop.f32.mrb[0].mxu0
      %v470 = vadd.f32 0.0, %v469
      %v471 = vpop.f32.mrb[0].mxu0
      %472 = vmatprep.mubr.f32.mxu0 %v367
      %473 = vmatmul.mubr.f32.gmra.mrb[0].mxu0 %v366
      %v474 = vpop.f32.mrb[0].mxu0
      %v475 = vadd.f32 0.0, %v474
      %v476 = vpop.f32.mrb[0].mxu0
      %477 = vmatprep.mubr.f32.mxu0 %v369
      %478 = vmatmul.mubr.f32.gmra.mrb[0].mxu0 %v368
      %v479 = vpop.f32.mrb[0].mxu0
      %v480 = vadd.f32 0.0, %v479
      %v481 = vpop.f32.mrb[0].mxu0
      %482 = vdwg.mxu0
      %v483 = vadd.f32 %v370, %v445
      %v484 = vadd.f32 %v371, %v450
      %v485 = vadd.f32 %v372, %v455
      %v486 = vadd.f32 %v373, %v460
      %v487 = vadd.f32 %v374, %v465
      %v488 = vadd.f32 %v375, %v470
      %v489 = vadd.f32 %v376, %v475
      %v490 = vadd.f32 %v377, %v480
      %vm491 = vcmask 39936
      %492 = vst.msk [vmem:[#allocation2] sm:$0xff] %vm491, %v483
      %493 = vst.msk [vmem:[#allocation2 + $0x8] sm:$0xff] %vm491, %v484
      %494 = vst.msk [vmem:[#allocation2 + $0x10] sm:$0xff] %vm491, %v485
      %495 = vst.msk [vmem:[#allocation2 + $0x18] sm:$0xff] %vm491, %v486
      %496 = vst.msk [vmem:[#allocation2 + $0x20] sm:$0xff] %vm491, %v487
      %497 = vst.msk [vmem:[#allocation2 + $0x28] sm:$0xff] %vm491, %v488
      %498 = vst.msk [vmem:[#allocation2 + $0x30] sm:$0xff] %vm491, %v489
      %499 = vst.msk [vmem:[#allocation2 + $0x38] sm:$0xff] %vm491, %v490
      // Predicated region
      $region41: #{tpu_custom_call.1} parent=35 // pred_check
        %p500 = pneg %p259
      $region42: #{tpu_custom_call.1} parent=35 // pred_check_branch
        %502 = sbr.rel (%p500) target = $region44
      $region43: #{tpu_custom_call.1} parent=35 // pred_region
        %v503 = vld [vmem:[#allocation2] sm:$0xff]
        %v504 = vld [vmem:[#allocation2 + $0x8] sm:$0xff]
        %v505 = vld [vmem:[#allocation2 + $0x10] sm:$0xff]
        %v506 = vld [vmem:[#allocation2 + $0x18] sm:$0xff]
        %v507 = vld [vmem:[#allocation2 + $0x20] sm:$0xff]
        %v508 = vld [vmem:[#allocation2 + $0x28] sm:$0xff]
        %v509 = vld [vmem:[#allocation2 + $0x30] sm:$0xff]
        %v510 = vld [vmem:[#allocation2 + $0x38] sm:$0xff]
        %v511 = vmax.f32 %v503, 1.0
        %v512 = vmax.f32 %v504, 1.0
        %v513 = vmax.f32 %v505, 1.0
        %v514 = vmax.f32 %v506, 1.0
        %v515 = vmax.f32 %v507, 1.0
        %v516 = vmax.f32 %v508, 1.0
        %v517 = vmax.f32 %v509, 1.0
        %v518 = vmax.f32 %v510, 1.0
        %v519 = vrcp.pop %v511
        %v520 = vrcp.pop %v512
        %v521 = vrcp.pop %v513
        %v522 = vrcp.pop %v514
        %v523 = vrcp.pop %v515
        %v524 = vrcp.pop %v516
        %v525 = vrcp.pop %v517
        %v526 = vrcp.pop %v518
        %528 = vset.pattern.permute.xlu0 4
        %529 = vperm.xlu0 %528, %v519
        %v530 = vpop.permute.xlu0 %529
        %533 = vset.pattern.permute.xlu0 4
        %534 = vperm.xlu0 %533, %v520
        %v535 = vpop.permute.xlu0 %534
        %538 = vset.pattern.permute.xlu0 4
        %539 = vperm.xlu0 %538, %v521
        %v540 = vpop.permute.xlu0 %539
        %543 = vset.pattern.permute.xlu0 4
        %544 = vperm.xlu0 %543, %v522
        %v545 = vpop.permute.xlu0 %544
        %548 = vset.pattern.permute.xlu0 4
        %549 = vperm.xlu0 %548, %v523
        %v550 = vpop.permute.xlu0 %549
        %553 = vset.pattern.permute.xlu0 4
        %554 = vperm.xlu0 %553, %v524
        %v555 = vpop.permute.xlu0 %554
        %558 = vset.pattern.permute.xlu0 4
        %559 = vperm.xlu0 %558, %v525
        %v560 = vpop.permute.xlu0 %559
        %563 = vset.pattern.permute.xlu0 4
        %564 = vperm.xlu0 %563, %v526
        %v565 = vpop.permute.xlu0 %564
        %v567 = vmul.f32 %v503, %v530
        %v568 = vmul.f32 %v504, %v535
        %v569 = vmul.f32 %v505, %v540
        %v570 = vmul.f32 %v506, %v545
        %v571 = vmul.f32 %v507, %v550
        %v572 = vmul.f32 %v508, %v555
        %v573 = vmul.f32 %v509, %v560
        %v574 = vmul.f32 %v510, %v565
        %v575 = vld [vmem:[%s2] sm:$0xf]
        %v576 = vld [vmem:[%s3] sm:$0x1]
        %v578 = vlaneseq
        %v579 = vshrl.u32 %v578, 7
        %v580 = vsub.s32 0, %v579
        %v581 = vrot.slane %v576, %v580
        %vm583 = vcmask 31744
        %v585 = vsel %vm583, %v567, 0
        %v588 = vsel %vm583, %v568, 0
        %v591 = vsel %vm583, %v569, 0
        %v594 = vsel %vm583, %v570, 0
        %v597 = vsel %vm583, %v571, 0
        %v600 = vsel %vm583, %v572, 0
        %v603 = vsel %vm583, %v573, 0
        %v606 = vsel %vm583, %v574, 0
        %vm608 = vcmask 1043456
        %v610 = vsel %vm608, %v575, 0
        %612 = vmatprep.subr.mxu0 0.0
        %613 = vmatpush1.msra.mxu0 %v610
        %614 = vmatprep.subr.mxu0 0.0
        %615 = vmatpush1.msra.mxu0 0.0
        %616 = vmatprep.subr.mxu0 0.0
        %617 = vmatpush1.msra.mxu0 0.0
        %618 = vmatprep.subr.mxu0 0.0
        %619 = vmatpush1.msra.mxu0 0.0
        %620 = vmatprep.subr.mxu0 0.0
        %621 = vmatpush1.msra.mxu0 0.0
        %622 = vmatprep.subr.mxu0 0.0
        %623 = vmatpush1.msra.mxu0 0.0
        %624 = vmatprep.subr.mxu0 0.0
        %625 = vmatpush1.msra.mxu0 0.0
        %626 = vmatprep.subr.mxu0 0.0
        %627 = vmatpush1.msra.mxu0 0.0
        %628 = vmatprep.subr.mxu0 0.0
        %629 = vmatpush1.msra.mxu0 0.0
        %630 = vmatprep.subr.mxu0 0.0
        %631 = vmatpush1.msra.mxu0 0.0
        %632 = vmatprep.subr.mxu0 0.0
        %633 = vmatpush1.msra.mxu0 0.0
        %634 = vmatprep.subr.mxu0 0.0
        %635 = vmatpush1.msra.mxu0 0.0
        %636 = vmatprep.subr.mxu0 0.0
        %637 = vmatpush1.msra.mxu0 0.0
        %638 = vmatprep.subr.mxu0 0.0
        %639 = vmatpush1.msra.mxu0 0.0
        %640 = vmatprep.subr.mxu0 0.0
        %641 = vmatpush1.msra.mxu0 0.0
        %642 = vmatprep.subr.mxu0 0.0
        %643 = vmatpush1.msra.mxu0 0.0
        %644 = vmatprep.subr.mxu0 0.0
        %645 = vmatpush1.msra.mxu0 0.0
        %646 = vmatprep.subr.mxu0 0.0
        %647 = vmatpush1.msra.mxu0 0.0
        %648 = vmatprep.subr.mxu0 0.0
        %649 = vmatpush1.msra.mxu0 0.0
        %650 = vmatprep.subr.mxu0 0.0
        %651 = vmatpush1.msra.mxu0 0.0
        %652 = vmatprep.subr.mxu0 0.0
        %653 = vmatpush1.msra.mxu0 0.0
        %654 = vmatprep.subr.mxu0 0.0
        %655 = vmatpush1.msra.mxu0 0.0
        %656 = vmatprep.subr.mxu0 0.0
        %657 = vmatpush1.msra.mxu0 0.0
        %658 = vmatprep.subr.mxu0 0.0
        %659 = vmatpush1.msra.mxu0 0.0
        %660 = vmatprep.subr.mxu0 0.0
        %661 = vmatpush1.msra.mxu0 0.0
        %662 = vmatprep.subr.mxu0 0.0
        %663 = vmatpush1.msra.mxu0 0.0
        %664 = vmatprep.subr.mxu0 0.0
        %665 = vmatpush1.msra.mxu0 0.0
        %666 = vmatprep.subr.mxu0 0.0
        %667 = vmatpush1.msra.mxu0 0.0
        %668 = vmatprep.subr.mxu0 0.0
        %669 = vmatpush1.msra.mxu0 0.0
        %670 = vmatprep.subr.mxu0 0.0
        %671 = vmatpush1.msra.mxu0 0.0
        %672 = vmatprep.subr.mxu0 0.0
        %673 = vmatpush1.msra.mxu0 0.0
        %674 = vmatprep.subr.mxu0 0.0
        %675 = vmatpush1.msra.mxu0 0.0
        %676 = vmatprep.mubr.f32.mxu0 0.0
        %677 = vmatmul.mubr.f32.gmra.mrb[0].mxu0 %v585
        %v678 = vpop.f32.mrb[0].mxu0
        %v679 = vadd.f32 %v581, %v678
        %v680 = vpop.f32.mrb[0].mxu0
        %681 = vmatprep.mubr.f32.mxu0 0.0
        %682 = vmatmul.mubr.f32.gmra.mrb[0].mxu0 %v588
        %v683 = vpop.f32.mrb[0].mxu0
        %v684 = vadd.f32 %v581, %v683
        %v685 = vpop.f32.mrb[0].mxu0
        %686 = vmatprep.mubr.f32.mxu0 0.0
        %687 = vmatmul.mubr.f32.gmra.mrb[0].mxu0 %v591
        %v688 = vpop.f32.mrb[0].mxu0
        %v689 = vadd.f32 %v581, %v688
        %v690 = vpop.f32.mrb[0].mxu0
        %691 = vmatprep.mubr.f32.mxu0 0.0
        %692 = vmatmul.mubr.f32.gmra.mrb[0].mxu0 %v594
        %v693 = vpop.f32.mrb[0].mxu0
        %v694 = vadd.f32 %v581, %v693
        %v695 = vpop.f32.mrb[0].mxu0
        %696 = vmatprep.mubr.f32.mxu0 0.0
        %697 = vmatmul.mubr.f32.gmra.mrb[0].mxu0 %v597
        %v698 = vpop.f32.mrb[0].mxu0
        %v699 = vadd.f32 %v581, %v698
        %v700 = vpop.f32.mrb[0].mxu0
        %701 = vmatprep.mubr.f32.mxu0 0.0
        %702 = vmatmul.mubr.f32.gmra.mrb[0].mxu0 %v600
        %v703 = vpop.f32.mrb[0].mxu0
        %v704 = vadd.f32 %v581, %v703
        %v705 = vpop.f32.mrb[0].mxu0
        %706 = vmatprep.mubr.f32.mxu0 0.0
        %707 = vmatmul.mubr.f32.gmra.mrb[0].mxu0 %v603
        %v708 = vpop.f32.mrb[0].mxu0
        %v709 = vadd.f32 %v581, %v708
        %v710 = vpop.f32.mrb[0].mxu0
        %711 = vmatprep.mubr.f32.mxu0 0.0
        %712 = vmatmul.mubr.f32.gmra.mrb[0].mxu0 %v606
        %v713 = vpop.f32.mrb[0].mxu0
        %v714 = vadd.f32 %v581, %v713
        %v715 = vpop.f32.mrb[0].mxu0
        %716 = vdwg.mxu0
        %vm717 = vcmask 261120
        %718 = vst.msk [vmem:[%s258] sm:$0xff] %vm717, %v679
        %719 = vst.msk [vmem:[%s258 + $0x8] sm:$0xff] %vm717, %v684
        %720 = vst.msk [vmem:[%s258 + $0x10] sm:$0xff] %vm717, %v689
        %721 = vst.msk [vmem:[%s258 + $0x18] sm:$0xff] %vm717, %v694
        %722 = vst.msk [vmem:[%s258 + $0x20] sm:$0xff] %vm717, %v699
        %723 = vst.msk [vmem:[%s258 + $0x28] sm:$0xff] %vm717, %v704
        %724 = vst.msk [vmem:[%s258 + $0x30] sm:$0xff] %vm717, %v709
        %725 = vst.msk [vmem:[%s258 + $0x38] sm:$0xff] %vm717, %v714
      $region44: #{tpu_custom_call.1} parent=35 // pred_fallthru
        _
      %p726 = scmp.lt.s32.totalorder %s19, 1
      %s727 = scalar_select %p726, %s19, 1
      %s728 = smul.addr %s727, 8
      %s729 = smul.addr %s728, 8
      %s730 = scalar_lea.vmem %s4, %s729
      // Predicated region
      $region45: #{tpu_custom_call.1} parent=35 // pred_check
        %p731 = pneg %p143
      $region46: #{tpu_custom_call.1} parent=35 // pred_check_branch
        %733 = sbr.rel (%p731) target = $region48
      $region47: #{tpu_custom_call.1} parent=35 // pred_region
        _
      $region48: #{tpu_custom_call.1} parent=35 // pred_fallthru
        _
    $region36: #{tpu_custom_call.1} parent=5 // pred_fallthru
      _
    %p734 = scmp.le.s32.totalorder 2, %s10
    // Predicated region
    $region49: #{tpu_custom_call.1} parent=5 // pred_check
      %p735 = pneg %p734
    $region50: #{tpu_custom_call.1} parent=5 // pred_check_branch
      %737 = sbr.rel (%p735) target = $region52
    $region51: #{tpu_custom_call.1} parent=5 // pred_region
      %s738 = ssub.s32 %s10, 2
      // Predicated region
      $region53: #{tpu_custom_call.1} parent=51 // pred_check
        %p739 = pneg %p149
      $region54: #{tpu_custom_call.1} parent=51 // pred_check_branch
        %741 = sbr.rel (%p739) target = $region56
      $region55: #{tpu_custom_call.1} parent=51 // pred_region
        %p742 = scmp.lt.s32.totalorder %s21, 1
        %s743 = scalar_select %p742, %s21, 1
        %s744 = smul.addr %s743, 8
        %s745 = smul.addr %s744, 8
        %s746 = scalar_lea.vmem %s4, %s745
      $region56: #{tpu_custom_call.1} parent=51 // pred_fallthru
        _
    $region52: #{tpu_custom_call.1} parent=5 // pred_fallthru
      _
  $region6: #{tpu_custom_call.1} parent=0 // loop_footer
    %s14 = sadd.s32 1, %s10
  $region7: #{tpu_custom_call.1} parent=0 // loop_footer_branch
    %9 = sbr.rel target = $region3
  $region8: #{tpu_custom_call.1} parent=0 // loop_exit
    _

</llo_original>
